<compile_context>
chip_gen: v5e
topology: v5e:2x2
jax: 0.10.0
libtpu: 0.0.40
codegen_flags: <defaults>
</compile_context>

<pallas_src>
import jax
import jax.numpy as jnp
from jax import lax
from jax.experimental import pallas as pl
from jax.experimental.pallas import tpu as pltpu


def _round_up(x, m):
    return ((x + m - 1) // m) * m


def _select_tiles(B, S, D, hs_itemsize, Hp, P):
    """Pick (tile_b, tile_s, vmem_limit_bytes) from the device's VMEM capacity."""
    tile_b = 64 if B >= 128 else 8
    try:
        vmem_cap = int(pltpu.get_tpu_info().vmem_capacity_bytes)
    except Exception:
        vmem_cap = 64 * 1024 * 1024          # conservative fallback (v7x per-TC)

    budget = int(vmem_cap * 0.70)            # headroom for compiler scratch
    # resident weights/biases + output blocks + accumulators (+ slack);
    # count x2 for double-buffered allocations.
    fixed = (2 * 4 * (D * Hp + Hp + Hp * P + P)
             + 2 * 4 * tile_b * (Hp + P)
             + 4 * tile_b * (D + 1)
             + (4 << 20))
    per_s = 2 * tile_b * (D * hs_itemsize + 4)    # hs block + f32 mask block, x2 buffers
    avail = max(budget - fixed, per_s * 8)
    max_s = avail // per_s

    if S <= max_s:
        tile_s = S                       # single (full) seq tile
    else:
        # < full S -> must be a multiple of 128 (mask block last dim)
        tile_s = max(128, min(1024, (max_s // 128) * 128))
        if tile_s >= S:
            tile_s = S

    need = fixed + per_s * tile_s + (8 << 20)
    vmem_limit = int(min(max(need, 32 << 20), int(vmem_cap * 0.90)))
    return tile_b, int(tile_s), vmem_limit


def _make_kernel(seq_len, tile_s, ragged_s):
    """Grid = (batch_tiles, seq_tiles, 4).  Reduction over (seq, layer)."""

    def kernel(hs_ref, mask_ref,
               w_enc_ref, b_enc_ref, w_heads_ref, b_heads_ref,
               feat_ref, heads_ref,
               pooled_acc, denom_acc):
        s = pl.program_id(1)
        l = pl.program_id(2)
        last_s = pl.num_programs(1) - 1
        last_l = pl.num_programs(2) - 1

        @pl.when(jnp.logical_and(s == 0, l == 0))
        def _init():
            pooled_acc[...] = jnp.zeros_like(pooled_acc)
            denom_acc[...] = jnp.zeros_like(denom_acc)

        hs = hs_ref[...]                               # (tile_b, tile_s, D), native dtype
        mask = mask_ref[...].astype(jnp.float32)       # (tile_b, tile_s)

        if ragged_s:
            # Ragged last seq tile: out-of-range block contents are stale VMEM
            # (possibly NaN); zero BOTH hs and mask before accumulating.
            col = lax.broadcasted_iota(jnp.int32, mask.shape, 1)
            valid = (s * tile_s + col) < seq_len
            mask = jnp.where(valid, mask, 0.0)
            hs = jnp.where(valid[:, :, None], hs, jnp.zeros_like(hs))

        # Masked seq-sum on the MXU:  (b,1,s) x (b,s,d) -> (b,1,d), f32 accumulate.
        mask_m = mask.astype(hs.dtype).reshape(mask.shape[0], 1, mask.shape[1])
        contrib = lax.dot_general(
            mask_m, hs,
            dimension_numbers=(((2,), (1,)), ((0,), (0,))),
            preferred_element_type=jnp.float32)        # (tile_b, 1, D)
        pooled_acc[...] += contrib.reshape(contrib.shape[0], contrib.shape[2])

        # mask denominator counted once per seq tile (layer 0 only)
        @pl.when(l == 0)
        def _denom():
            denom_acc[...] += jnp.sum(mask, axis=1, keepdims=True)

        @pl.when(jnp.logical_and(s == last_s, l == last_l))
        def _finalize():
            # masked mean pooling
            pooled = pooled_acc[...] * pl.reciprocal(denom_acc[...], approx=False)
            # MLPEncoder: Linear + ReLU (dropout is identity in eval mode)
            h = jnp.dot(pooled, w_enc_ref[...],
                        preferred_element_type=jnp.float32) + b_enc_ref[...]
            h = jnp.maximum(h, 0.0)
            feat_ref[...] = h
            # fused fc_out_1 / fc_out_2: one MXU push, one lane-dense store
            heads_ref[...] = jnp.dot(h, w_heads_ref[...],
                                     preferred_element_type=jnp.float32) + b_heads_ref[...]

    return kernel


def e2e_model_forward(hidden_states, attention_masks, params):
    """hidden_states: (L, B, S, D) backbone hidden states; attention_masks: (B, S)."""
    L, B, S, D = hidden_states.shape
    assert L >= 4, "need at least 4 hidden-state layers"

    w_enc, b_enc = params["w_enc"], params["b_enc"]    # (D, H), (1, H)
    w1, b1 = params["w1"], params["b1"]                # (H, O1), (1, O1)
    w2, b2 = params["w2"], params["b2"]                # (H, O2), (1, O2)
    H = w_enc.shape[1]
    O1 = w1.shape[1]
    O2 = w2.shape[1]

    Hp = _round_up(H, 128)              # lane-dense feature output
    P = _round_up(O1 + O2, 128)         # fused, lane-dense head output

    tile_b, tile_s, vmem_limit = _select_tiles(
        B, S, D, hidden_states.dtype.itemsize, Hp, P)

    n_bt = pl.cdiv(B, tile_b)
    n_st = pl.cdiv(S, tile_s)
    Bp = n_bt * tile_b                  # output rows allocated (never copied)
    ragged_s = (S % tile_s) != 0
    layer_off = L - 4                   # layer sum is order independent

    mask_f = attention_masks.astype(jnp.float32)

    # Tiny weight arrays: pad to lane-dense shapes (cheap, done once).
    w_enc_p = jnp.pad(w_enc, ((0, 0), (0, Hp - H)))
    b_enc_p = jnp.pad(b_enc, ((0, 0), (0, Hp - H)))
    w_heads = jnp.pad(jnp.concatenate([w1, w2], axis=1),
                      ((0, Hp - H), (0, P - (O1 + O2))))
    b_heads = jnp.pad(jnp.concatenate([b1, b2], axis=1),
                      ((0, 0), (0, P - (O1 + O2))))

    kernel = _make_kernel(S, tile_s, ragged_s)
    grid = (n_bt, n_st, 4)

    feat_out, heads_out = pl.pallas_call(
        kernel,
        out_shape=(
            jax.ShapeDtypeStruct((Bp, Hp), jnp.float32),
            jax.ShapeDtypeStruct((Bp, P), jnp.float32),
        ),
        grid_spec=pltpu.PrefetchScalarGridSpec(
            num_scalar_prefetch=0,
            grid=grid,
            in_specs=[
                # one layer of one (batch, seq) tile per step, streamed straight
                # from the full (L,B,S,D) tensor; auto double-buffered DMA.
                pl.BlockSpec((None, tile_b, tile_s, D),
                             lambda b, s, l: (l + layer_off, b, s, 0)),
                pl.BlockSpec((tile_b, tile_s), lambda b, s, l: (b, s)),
                # small weights/biases: constant index map -> fetched once, resident
                pl.BlockSpec((D, Hp), lambda b, s, l: (0, 0)),
                pl.BlockSpec((1, Hp), lambda b, s, l: (0, 0)),
                pl.BlockSpec((Hp, P), lambda b, s, l: (0, 0)),
                pl.BlockSpec((1, P), lambda b, s, l: (0, 0)),
            ],
            out_specs=(
                pl.BlockSpec((tile_b, Hp), lambda b, s, l: (b, 0)),
                pl.BlockSpec((tile_b, P), lambda b, s, l: (b, 0)),
            ),
            scratch_shapes=[
                pltpu.VMEM((tile_b, D), jnp.float32),   # pooled accumulator
                pltpu.VMEM((tile_b, 1), jnp.float32),   # mask-sum accumulator
            ],
        ),
        compiler_params=pltpu.CompilerParams(
            dimension_semantics=("parallel", "arbitrary", "arbitrary"),
            vmem_limit_bytes=vmem_limit,
        ),
    )(hidden_states, mask_f, w_enc_p, b_enc_p, w_heads, b_heads)

    features = feat_out[:B, :H]
    emos_out = heads_out[:B, :O1]
    vals_out = heads_out[:B, O1:O1 + O2]
    interloss = jnp.array(0, dtype=jnp.int32)           # torch.tensor(0)
    return features, emos_out, vals_out, interloss


def init_params(key, feat_dim, hidden_dim, output_dim1, output_dim2):
    k1, k2, k3, k4, k5, k6 = jax.random.split(key, 6)
    # weights stored as (in, out): already-transposed PyTorch Linear layout
    s_enc = 1.0 / jnp.sqrt(feat_dim)
    s_head = 1.0 / jnp.sqrt(hidden_dim)
    return {
        "w_enc": jax.random.uniform(k1, (feat_dim, hidden_dim), jnp.float32,
                                    -s_enc, s_enc),
        "b_enc": jax.random.uniform(k2, (1, hidden_dim), jnp.float32,
                                    -s_enc, s_enc),
        "w1": jax.random.uniform(k3, (hidden_dim, output_dim1), jnp.float32,
                                 -s_head, s_head),
        "b1": jax.random.uniform(k4, (1, output_dim1), jnp.float32,
                                 -s_head, s_head),
        "w2": jax.random.uniform(k5, (hidden_dim, output_dim2), jnp.float32,
                                 -s_head, s_head),
        "b2": jax.random.uniform(k6, (1, output_dim2), jnp.float32,
                                 -s_head, s_head),
    }


if __name__ == "__main__":
    # Small synthetic shapes consistent with the text-modality forward path.
    L, B, S, D = 6, 2, 8, 32        # backbone layers, batch, seq, e2e_dim
    H, O1, O2 = 32, 6, 1            # hidden_dim, output_dim1 (emos), output_dim2 (vals)

    key = jax.random.PRNGKey(0)
    k_hs, k_params = jax.random.split(key)

    # TODO(synk): pretrain_model (HF transformer) backbone replaced with synthetic
    # hidden states; its attention/FFN stack is not reproducible without a checkpoint.
    # Streamed in bf16 (halves HBM traffic of the dominant tensor).
    hidden_states = jax.random.normal(k_hs, (L, B, S, D), jnp.bfloat16)
    attention_masks = jnp.array(
        [[1, 1, 1, 1, 1, 1, 1, 1],
         [1, 1, 1, 1, 1, 0, 0, 0]], dtype=jnp.float32)   # (B, S)

    params = init_params(k_params, D, H, O1, O2)

    features, emos_out, vals_out, interloss = e2e_model_forward(
        hidden_states, attention_masks, params)
    jax.block_until_ready((features, emos_out, vals_out, interloss))

    # Pure-JAX reference check of the same math (upcast once, like the kernel).
    hs4 = hidden_states[-4:].astype(jnp.float32)
    summed = jnp.sum(hs4, axis=0)
    masked = summed * attention_masks[:, :, None]
    pooled = jnp.sum(masked, axis=1) / jnp.sum(attention_masks, axis=1,
                                               keepdims=True)
    h_ref = jnp.maximum(pooled @ params["w_enc"] + params["b_enc"], 0.0)
    emos_ref = h_ref @ params["w1"] + params["b1"]
    vals_ref = h_ref @ params["w2"] + params["b2"]

    assert features.shape == (B, H)
    assert emos_out.shape == (B, O1)
    assert vals_out.shape == (B, O2)
    assert jnp.allclose(features, h_ref, atol=1e-3, rtol=1e-3)
    assert jnp.allclose(emos_out, emos_ref, atol=1e-3, rtol=1e-3)
    assert jnp.allclose(vals_out, vals_ref, atol=1e-3, rtol=1e-3)
    assert int(interloss) == 0

    print("KERNEL_OK")
</pallas_src>

<mosaic_0001>
module attributes {stable_mosaic.version = 11 : i64} {
  func.func @kernel(%arg0: i32, %arg1: i32, %arg2: i32, %arg3: memref<1x8x8x32xbf16, #tpu.memory_space<vmem>>, %arg4: memref<8x8xf32, #tpu.memory_space<vmem>>, %arg5: memref<32x128xf32, #tpu.memory_space<vmem>>, %arg6: memref<1x128xf32, #tpu.memory_space<vmem>>, %arg7: memref<128x128xf32, #tpu.memory_space<vmem>>, %arg8: memref<1x128xf32, #tpu.memory_space<vmem>>, %arg9: memref<8x128xf32, #tpu.memory_space<vmem>>, %arg10: memref<8x128xf32, #tpu.memory_space<vmem>>, %arg11: memref<8x32xf32, #tpu.memory_space<vmem>>, %arg12: memref<8x1xf32, #tpu.memory_space<vmem>>) attributes {dimension_semantics = [#tpu.dimension_semantics<parallel>, #tpu.dimension_semantics<arbitrary>, #tpu.dimension_semantics<arbitrary>], iteration_bounds = array<i64: 1, 1, 4>, scalar_prefetch = 0 : i64, scratch_operands = 2 : i64, tpu.core_type = #tpu.core_type<tc>, window_params = [{transform_indices = @transform_0, window_bounds = array<i64: 1, 8, 8, 32>}, {transform_indices = @transform_1, window_bounds = array<i64: 8, 8>}, {pipeline_mode = #tpu.pipeline_mode<synchronous>, transform_indices = @transform_2, window_bounds = array<i64: 32, 128>}, {pipeline_mode = #tpu.pipeline_mode<synchronous>, transform_indices = @transform_3, window_bounds = array<i64: 1, 128>}, {pipeline_mode = #tpu.pipeline_mode<synchronous>, transform_indices = @transform_4, window_bounds = array<i64: 128, 128>}, {pipeline_mode = #tpu.pipeline_mode<synchronous>, transform_indices = @transform_5, window_bounds = array<i64: 1, 128>}, {transform_indices = @transform_6, window_bounds = array<i64: 8, 128>}, {transform_indices = @transform_7, window_bounds = array<i64: 8, 128>}]} {
    %c0_i32 = arith.constant 0 : i32
    %0 = arith.cmpi eq, %arg1, %c0_i32 : i32
    %c0_i32_0 = arith.constant 0 : i32
    %1 = arith.cmpi eq, %arg2, %c0_i32_0 : i32
    %2 = arith.andi %0, %1 : i1
    %3 = arith.extui %2 : i1 to i32
    %c0_i32_1 = arith.constant 0 : i32
    %4 = arith.cmpi ne, %3, %c0_i32_1 : i32
    scf.if %4 {
      %cst_15 = arith.constant 0.000000e+00 : f32
      %23 = vector.broadcast %cst_15 : f32 to vector<8x32xf32>
      %c0_16 = arith.constant 0 : index
      %c0_17 = arith.constant 0 : index
      %24 = vector.load %arg11[%c0_16, %c0_17] : memref<8x32xf32, #tpu.memory_space<vmem>>, vector<8x32xf32>
      tpu.vector_store %arg11[%c0_16, %c0_17], %23 {strides = array<i32>} : memref<8x32xf32, #tpu.memory_space<vmem>>, vector<8x32xf32>,
      %cst_18 = arith.constant 0.000000e+00 : f32
      %25 = vector.broadcast %cst_18 : f32 to vector<8x1xf32>
      %c0_19 = arith.constant 0 : index
      %c0_20 = arith.constant 0 : index
      %26 = vector.load %arg12[%c0_19, %c0_20] : memref<8x1xf32, #tpu.memory_space<vmem>>, vector<8x1xf32>
      tpu.vector_store %arg12[%c0_19, %c0_20], %25 {strides = array<i32>} : memref<8x1xf32, #tpu.memory_space<vmem>>, vector<8x1xf32>,
    } else {
    }
    %c0 = arith.constant 0 : index
    %c0_2 = arith.constant 0 : index
    %c0_3 = arith.constant 0 : index
    %c0_4 = arith.constant 0 : index
    %5 = vector.load %arg3[%c0, %c0_2, %c0_3, %c0_4] : memref<1x8x8x32xbf16, #tpu.memory_space<vmem>>, vector<1x8x8x32xbf16>
    %6 = vector.shape_cast %5 : vector<1x8x8x32xbf16> to vector<8x8x32xbf16>
    %c0_5 = arith.constant 0 : index
    %c0_6 = arith.constant 0 : index
    %7 = vector.load %arg4[%c0_5, %c0_6] : memref<8x8xf32, #tpu.memory_space<vmem>>, vector<8x8xf32>
    %8 = arith.truncf %7 : vector<8x8xf32> to vector<8x8xbf16>
    %9 = vector.shape_cast %8 : vector<8x8xbf16> to vector<8x1x8xbf16>
    %cst = arith.constant dense<0.000000e+00> : vector<8x1x32xf32>
    %10 = tpu.matmul %9, %6, %cst {dimension_numbers = #tpu.dot_dimension_numbers<[2], [1], [1], [2], [0, 0, 0, 1, 1, 2], [0], [0]>} : vector<8x1x8xbf16>, vector<8x8x32xbf16>, vector<8x1x32xf32> -> vector<8x1x32xf32>
    %c0_7 = arith.constant 0 : index
    %c0_8 = arith.constant 0 : index
    %11 = vector.load %arg11[%c0_7, %c0_8] : memref<8x32xf32, #tpu.memory_space<vmem>>, vector<8x32xf32>
    %12 = vector.shape_cast %10 : vector<8x1x32xf32> to vector<8x32xf32>
    %13 = arith.addf %11, %12 : vector<8x32xf32>
    %c0_9 = arith.constant 0 : index
    %c0_10 = arith.constant 0 : index
    %14 = vector.load %arg11[%c0_9, %c0_10] : memref<8x32xf32, #tpu.memory_space<vmem>>, vector<8x32xf32>
    tpu.vector_store %arg11[%c0_9, %c0_10], %13 {strides = array<i32>} : memref<8x32xf32, #tpu.memory_space<vmem>>, vector<8x32xf32>,
    %c0_i32_11 = arith.constant 0 : i32
    %15 = arith.cmpi eq, %arg2, %c0_i32_11 : i32
    %16 = arith.extui %15 : i1 to i32
    %c0_i32_12 = arith.constant 0 : i32
    %17 = arith.cmpi ne, %16, %c0_i32_12 : i32
    scf.if %17 {
      %c0_15 = arith.constant 0 : index
      %c0_16 = arith.constant 0 : index
      %23 = vector.load %arg12[%c0_15, %c0_16] : memref<8x1xf32, #tpu.memory_space<vmem>>, vector<8x1xf32>
      %cst_17 = arith.constant dense<0.000000e+00> : vector<8xf32>
      %24 = vector.multi_reduction <add>, %7, %cst_17 [1] : vector<8x8xf32> to vector<8xf32>
      %25 = vector.shape_cast %24 : vector<8xf32> to vector<8x1xf32>
      %26 = arith.addf %23, %25 : vector<8x1xf32>
      %c0_18 = arith.constant 0 : index
      %c0_19 = arith.constant 0 : index
      %27 = vector.load %arg12[%c0_18, %c0_19] : memref<8x1xf32, #tpu.memory_space<vmem>>, vector<8x1xf32>
      tpu.vector_store %arg12[%c0_18, %c0_19], %26 {strides = array<i32>} : memref<8x1xf32, #tpu.memory_space<vmem>>, vector<8x1xf32>,
    } else {
    }
    %c0_i32_13 = arith.constant 0 : i32
    %18 = arith.cmpi eq, %arg1, %c0_i32_13 : i32
    %c3_i32 = arith.constant 3 : i32
    %19 = arith.cmpi eq, %arg2, %c3_i32 : i32
    %20 = arith.andi %18, %19 : i1
    %21 = arith.extui %20 : i1 to i32
    %c0_i32_14 = arith.constant 0 : i32
    %22 = arith.cmpi ne, %21, %c0_i32_14 : i32
    scf.if %22 {
      %c0_15 = arith.constant 0 : index
      %c0_16 = arith.constant 0 : index
      %23 = vector.load %arg11[%c0_15, %c0_16] : memref<8x32xf32, #tpu.memory_space<vmem>>, vector<8x32xf32>
      %c0_17 = arith.constant 0 : index
      %c0_18 = arith.constant 0 : index
      %24 = vector.load %arg12[%c0_17, %c0_18] : memref<8x1xf32, #tpu.memory_space<vmem>>, vector<8x1xf32>
      %25 = tpu.reciprocal %24 : vector<8x1xf32> -> vector<8x1xf32>
      %26 = vector.broadcast %25 : vector<8x1xf32> to vector<8x32xf32>
      %27 = arith.mulf %23, %26 : vector<8x32xf32>
      %c0_19 = arith.constant 0 : index
      %c0_20 = arith.constant 0 : index
      %28 = vector.load %arg5[%c0_19, %c0_20] : memref<32x128xf32, #tpu.memory_space<vmem>>, vector<32x128xf32>
      %cst_21 = arith.constant dense<0.000000e+00> : vector<8x128xf32>
      %29 = tpu.matmul %27, %28, %cst_21 {dimension_numbers = #tpu.dot_dimension_numbers<[1], [0], [0], [1], [0, 0, 1, 1], [], []>} : vector<8x32xf32>, vector<32x128xf32>, vector<8x128xf32> -> vector<8x128xf32>
      %c0_22 = arith.constant 0 : index
      %c0_23 = arith.constant 0 : index
      %30 = vector.load %arg6[%c0_22, %c0_23] : memref<1x128xf32, #tpu.memory_space<vmem>>, vector<1x128xf32>
      %31 = vector.broadcast %30 : vector<1x128xf32> to vector<8x128xf32>
      %32 = arith.addf %29, %31 : vector<8x128xf32>
      %cst_24 = arith.constant 0.000000e+00 : f32
      %33 = vector.broadcast %cst_24 : f32 to vector<8x128xf32>
      %34 = arith.maximumf %32, %33 : vector<8x128xf32>
      %c0_25 = arith.constant 0 : index
      %c0_26 = arith.constant 0 : index
      %35 = vector.load %arg9[%c0_25, %c0_26] : memref<8x128xf32, #tpu.memory_space<vmem>>, vector<8x128xf32>
      tpu.vector_store %arg9[%c0_25, %c0_26], %34 {strides = array<i32>} : memref<8x128xf32, #tpu.memory_space<vmem>>, vector<8x128xf32>,
      %c0_27 = arith.constant 0 : index
      %c0_28 = arith.constant 0 : index
      %36 = vector.load %arg7[%c0_27, %c0_28] : memref<128x128xf32, #tpu.memory_space<vmem>>, vector<128x128xf32>
      %cst_29 = arith.constant dense<0.000000e+00> : vector<8x128xf32>
      %37 = tpu.matmul %34, %36, %cst_29 {dimension_numbers = #tpu.dot_dimension_numbers<[1], [0], [0], [1], [0, 0, 1, 1], [], []>} : vector<8x128xf32>, vector<128x128xf32>, vector<8x128xf32> -> vector<8x128xf32>
      %c0_30 = arith.constant 0 : index
      %c0_31 = arith.constant 0 : index
      %38 = vector.load %arg8[%c0_30, %c0_31] : memref<1x128xf32, #tpu.memory_space<vmem>>, vector<1x128xf32>
      %39 = vector.broadcast %38 : vector<1x128xf32> to vector<8x128xf32>
      %40 = arith.addf %37, %39 : vector<8x128xf32>
      %c0_32 = arith.constant 0 : index
      %c0_33 = arith.constant 0 : index
      %41 = vector.load %arg10[%c0_32, %c0_33] : memref<8x128xf32, #tpu.memory_space<vmem>>, vector<8x128xf32>
      tpu.vector_store %arg10[%c0_32, %c0_33], %40 {strides = array<i32>} : memref<8x128xf32, #tpu.memory_space<vmem>>, vector<8x128xf32>,
    } else {
    }
    return
  }
  func.func @transform_0(%arg0: i32, %arg1: i32, %arg2: i32) -> (i32, i32, i32, i32) {
    %c2_i32 = arith.constant 2 : i32
    %0 = arith.addi %arg2, %c2_i32 : i32
    %c0_i32 = arith.constant 0 : i32
    %c0_i32_0 = arith.constant 0 : i32
    return %0, %arg0, %arg1, %c0_i32 : i32, i32, i32, i32
  }
  func.func @transform_1(%arg0: i32, %arg1: i32, %arg2: i32) -> (i32, i32) {
    %c0_i32 = arith.constant 0 : i32
    return %arg0, %arg1 : i32, i32
  }
  func.func @transform_2(%arg0: i32, %arg1: i32, %arg2: i32) -> (i32, i32) {
    %c0_i32 = arith.constant 0 : i32
    %c0_i32_0 = arith.constant 0 : i32
    %c0_i32_1 = arith.constant 0 : i32
    return %c0_i32, %c0_i32_0 : i32, i32
  }
  func.func @transform_3(%arg0: i32, %arg1: i32, %arg2: i32) -> (i32, i32) {
    %c0_i32 = arith.constant 0 : i32
    %c0_i32_0 = arith.constant 0 : i32
    %c0_i32_1 = arith.constant 0 : i32
    return %c0_i32, %c0_i32_0 : i32, i32
  }
  func.func @transform_4(%arg0: i32, %arg1: i32, %arg2: i32) -> (i32, i32) {
    %c0_i32 = arith.constant 0 : i32
    %c0_i32_0 = arith.constant 0 : i32
    %c0_i32_1 = arith.constant 0 : i32
    return %c0_i32, %c0_i32_0 : i32, i32
  }
  func.func @transform_5(%arg0: i32, %arg1: i32, %arg2: i32) -> (i32, i32) {
    %c0_i32 = arith.constant 0 : i32
    %c0_i32_0 = arith.constant 0 : i32
    %c0_i32_1 = arith.constant 0 : i32
    return %c0_i32, %c0_i32_0 : i32, i32
  }
  func.func @transform_6(%arg0: i32, %arg1: i32, %arg2: i32) -> (i32, i32) {
    %c0_i32 = arith.constant 0 : i32
    %c0_i32_0 = arith.constant 0 : i32
    return %arg0, %c0_i32 : i32, i32
  }
  func.func @transform_7(%arg0: i32, %arg1: i32, %arg2: i32) -> (i32, i32) {
    %c0_i32 = arith.constant 0 : i32
    %c0_i32_0 = arith.constant 0 : i32
    return %arg0, %c0_i32 : i32, i32
  }
}

</mosaic_0001>

<llo_original>
// kernel: tpu_custom_call.1
$region0: #{tpu_custom_call.1}
  #allocation0 [shape = 'u32[]', space=smem, size = 0x4, offset = 0x4, fixed_abs, tag = 'smem constant byte address 0x4 - core index']
  #allocation1 [shape = 'u32[72,128]{1,0:T(1,128)}', space=vmem, size = 0x9000, scoped, tag = 'internal scratch']
  #allocation2 [shape = 'f32[8,32]{1,0:T(8,128)}', space=vmem, size = 0x1000, scoped, tag = 'scratch operand']
  #allocation3 [shape = 'f32[8,1]{1,0:T(8,128)}', space=vmem, size = 0x1000, scoped, tag = 'scratch operand']
  %s0 = inlined_call_operand.hbm [shape: bf16[6,2,8,32], index: 0, kind: input, shape index: {}]
  %s1 = inlined_call_operand.hbm [shape: f32[2,8], index: 1, kind: input, shape index: {}]
  %s2 = inlined_call_operand.hbm [shape: f32[32,128], index: 2, kind: input, shape index: {}]
  %s3 = inlined_call_operand.vmem [shape: f32[1,128], index: 3, kind: input, shape index: {}]
  %s4 = inlined_call_operand.hbm [shape: f32[128,128], index: 4, kind: input, shape index: {}]
  %s5 = inlined_call_operand.vmem [shape: f32[1,128], index: 5, kind: input, shape index: {}]
  %s6 = inlined_call_operand.hbm [shape: f32[8,128], index: 6, kind: output, shape index: {0}]
  %s7 = inlined_call_operand.hbm [shape: f32[8,128], index: 7, kind: output, shape index: {1}]
  %8 = xla_tuple %s6, %s7
  %s9 = sld [smem:[#allocation0]]
  $region93: #{tpu_custom_call.1} parent=0
    _
  %s11 = ssub.s32 1, %s9
  %s12 = scalar_select 0, %s11, %s9
  $region1: #{tpu_custom_call.1} parent=0
    #allocation4 [shape = 'u8[32768]{0}', space=vmem, size = 0x8000, scoped, tag = 'input window, operand 0']
    #allocation5 [shape = 's32[2]{0}', space=sflag, size = 0x8, scoped, tag = 'scoped memory for tpu_custom_call.1']
    #allocation6 [shape = 's32[2]{0}', space=sflag, size = 0x8, scoped, tag = 'scoped memory for tpu_custom_call.1']
    #allocation7 [shape = 'u8[4096]{0}', space=vmem, size = 0x1000, scoped, tag = 'input window, operand 1, single buffered']
    #allocation8 [shape = 's32[1]{0}', space=sflag, size = 0x4, scoped, tag = 'scoped memory for tpu_custom_call.1']
    #allocation9 [shape = 'u8[16384]{0}', space=vmem, size = 0x4000, scoped, tag = 'input window, operand 2, single buffered']
    #allocation10 [shape = 'u8[65536]{0}', space=vmem, size = 0x10000, scoped, tag = 'input window, operand 4, single buffered']
    #allocation11 [shape = 's32[1]{0}', space=sflag, size = 0x4, scoped, tag = 'scoped memory for tpu_custom_call.1']
    #allocation12 [shape = 'u8[4096]{0}', space=vmem, size = 0x1000, scoped, tag = 'output window, operand 0, single buffered']
    #allocation13 [shape = 'u8[4096]{0}', space=vmem, size = 0x1000, scoped, tag = 'output window, operand 1, single buffered']
    #allocation14 [shape = 's32[1]{0}', space=sflag, size = 0x4, scoped, tag = 'scoped memory for tpu_custom_call.1']
    %13 = vsyncpa [#allocation5], 0
    %s14 = scalar_lea.sflag [#allocation5], 1
    %15 = vsyncpa %s14, 0
    %16 = vsyncpa [#allocation8], 0
    %17 = vsyncpa [#allocation11], 0
    %18 = vsyncpa [#allocation6], 0
    %19 = vsyncpa [#allocation14], 0
    loop: start=0, step=1, limit=6
    $region2: #{tpu_custom_call.1} parent=1 // loop_pre_header
      _
    $region3: #{tpu_custom_call.1} parent=1 // loop_header
      %s21 = sphi 0, %s25
      %p22 = scmp.ge.s32.totalorder %s21, 6
      %s28 = sphi 0, %s47
      %s29 = sphi 0, %s43
      %s30 = sphi 0, %s39
      %s31 = sphi 0, %s28
      %s32 = sphi 0, %s29
      %s33 = sphi 0, %s30
      %s34 = sphi 0, %s31
      %s35 = sphi 0, %s32
      %s36 = sphi 0, %s33
      %s56 = sphi 0, %s58
      %s59 = sphi 0, %s56
      %s60 = sphi 0, %s59
      %s76 = sphi 0, %s60
      %s84 = sphi 0, %s86
      %s87 = sphi 0, %s84
      %s88 = sphi 0, %s87
      %s104 = sphi 0, %s88
      %s108 = sphi 0, %s108
      %s110 = sphi 0, %s108
      %s111 = sphi 0, %s110
      %s125 = sphi 0, %s111
      %s129 = sphi 0, %s129
      %s131 = sphi 0, %s129
      %s132 = sphi 0, %s131
      %s146 = sphi 0, %s132
      %s150 = sphi 0, %s150
      %s152 = sphi 0, %s150
      %s153 = sphi 0, %s152
      %s167 = sphi 0, %s153
      %s171 = sphi 0, %s171
      %s173 = sphi 0, %s171
      %s174 = sphi 0, %s173
      %s188 = sphi 0, %s174
      %s194 = sphi 0, %s196
      %s197 = sphi 0, %s194
      %s198 = sphi 0, %s197
      %s214 = sphi 0, %s198
      %s220 = sphi 0, %s222
      %s223 = sphi 0, %s220
      %s224 = sphi 0, %s223
      %s240 = sphi 0, %s224
    $region4: #{tpu_custom_call.1} parent=1 // loop_header_branch
      %24 = sbr.rel (%p22) target = $region8
    $region5: #{tpu_custom_call.1} parent=1 // loop_body
      %s26 = ssub.s32 %s21, 1
      %s27 = ssub.s32 %s21, 2
      %s37 = sadd.s32 1, %s30
      %p38 = scmp.ge.s32.totalorder %s37, 4
      %s39 = scalar_select %p38, 0, %s37
      %s40 = sadd.s32 1, %s29
      %s41 = scalar_select %p38, %s40, %s29
      %p42 = scmp.ge.s32.totalorder %s41, 1
      %s43 = scalar_select %p42, 0, %s41
      %s44 = sadd.s32 1, %s28
      %s45 = scalar_select %p42, %s44, %s28
      %p46 = scmp.ge.s32.totalorder %s45, 1
      %s47 = scalar_select %p46, 0, %s45
      %s48 = sadd.s32 %s30, 2
      %s49 = sadd.s32 %s39, 2
      %s50 = ssub.s32 %s48, %s49
      %s51 = ssub.s32 %s28, %s47
      %s52 = sor.u32 %s50, %s51
      %s53 = ssub.s32 %s29, %s43
      %s54 = sor.u32 %s52, %s53
      %p55 = scmp.eq.s32.totalorder %s54, 0
      %s57 = sadd.s32 %s56, 1
      %s58 = scalar_select %p55, %s56, %s57
      %p61 = pneg %p55
      %p62 = scmp.eq.s32.totalorder %s21, 3
      %p63 = por %p61, %p62
      %p64 = scmp.ne.s32.totalorder %s56, %s59
      %p65 = scmp.eq.s32.totalorder %s21, 0
      %p66 = por %p64, %p65
      %p67 = scmp.ne.s32.totalorder %s56, %s59
      %p68 = scmp.eq.s32.totalorder %s26, 3
      %p69 = por %p67, %p68
      %p70 = scmp.ne.s32.totalorder %s59, %s60
      %p71 = scmp.eq.s32.totalorder %s26, 0
      %p72 = por %p70, %p71
      %p73 = scmp.ne.s32.totalorder %s59, %s60
      %p74 = scmp.eq.s32.totalorder %s27, 3
      %p75 = por %p73, %p74
      %p77 = scmp.ne.s32.totalorder %s60, %s76
      %p78 = scmp.eq.s32.totalorder %s27, 0
      %p79 = por %p77, %p78
      %s80 = ssub.s32 %s28, %s47
      %s81 = ssub.s32 %s29, %s43
      %s82 = sor.u32 %s80, %s81
      %p83 = scmp.eq.s32.totalorder %s82, 0
      %s85 = sadd.s32 %s84, 1
      %s86 = scalar_select %p83, %s84, %s85
      %p89 = pneg %p83
      %p90 = scmp.eq.s32.totalorder %s21, 3
      %p91 = por %p89, %p90
      %p92 = scmp.ne.s32.totalorder %s84, %s87
      %p93 = scmp.eq.s32.totalorder %s21, 0
      %p94 = por %p92, %p93
      %p95 = scmp.ne.s32.totalorder %s84, %s87
      %p96 = scmp.eq.s32.totalorder %s26, 3
      %p97 = por %p95, %p96
      %p98 = scmp.ne.s32.totalorder %s87, %s88
      %p99 = scmp.eq.s32.totalorder %s26, 0
      %p100 = por %p98, %p99
      %p101 = scmp.ne.s32.totalorder %s87, %s88
      %p102 = scmp.eq.s32.totalorder %s27, 3
      %p103 = por %p101, %p102
      %p105 = scmp.ne.s32.totalorder %s88, %s104
      %p106 = scmp.eq.s32.totalorder %s27, 0
      %p107 = por %p105, %p106
      %s109 = sadd.s32 %s108, 1
      %p112 = scmp.eq.s32.totalorder %s21, 3
      %p113 = scmp.ne.s32.totalorder %s108, %s110
      %p114 = scmp.eq.s32.totalorder %s21, 0
      %p115 = por %p113, %p114
      %p116 = scmp.ne.s32.totalorder %s108, %s110
      %p117 = scmp.eq.s32.totalorder %s26, 3
      %p118 = por %p116, %p117
      %p119 = scmp.ne.s32.totalorder %s110, %s111
      %p120 = scmp.eq.s32.totalorder %s26, 0
      %p121 = por %p119, %p120
      %p122 = scmp.ne.s32.totalorder %s110, %s111
      %p123 = scmp.eq.s32.totalorder %s27, 3
      %p124 = por %p122, %p123
      %p126 = scmp.ne.s32.totalorder %s111, %s125
      %p127 = scmp.eq.s32.totalorder %s27, 0
      %p128 = por %p126, %p127
      %s130 = sadd.s32 %s129, 1
      %p133 = scmp.eq.s32.totalorder %s21, 3
      %p134 = scmp.ne.s32.totalorder %s129, %s131
      %p135 = scmp.eq.s32.totalorder %s21, 0
      %p136 = por %p134, %p135
      %p137 = scmp.ne.s32.totalorder %s129, %s131
      %p138 = scmp.eq.s32.totalorder %s26, 3
      %p139 = por %p137, %p138
      %p140 = scmp.ne.s32.totalorder %s131, %s132
      %p141 = scmp.eq.s32.totalorder %s26, 0
      %p142 = por %p140, %p141
      %p143 = scmp.ne.s32.totalorder %s131, %s132
      %p144 = scmp.eq.s32.totalorder %s27, 3
      %p145 = por %p143, %p144
      %p147 = scmp.ne.s32.totalorder %s132, %s146
      %p148 = scmp.eq.s32.totalorder %s27, 0
      %p149 = por %p147, %p148
      %s151 = sadd.s32 %s150, 1
      %p154 = scmp.eq.s32.totalorder %s21, 3
      %p155 = scmp.ne.s32.totalorder %s150, %s152
      %p156 = scmp.eq.s32.totalorder %s21, 0
      %p157 = por %p155, %p156
      %p158 = scmp.ne.s32.totalorder %s150, %s152
      %p159 = scmp.eq.s32.totalorder %s26, 3
      %p160 = por %p158, %p159
      %p161 = scmp.ne.s32.totalorder %s152, %s153
      %p162 = scmp.eq.s32.totalorder %s26, 0
      %p163 = por %p161, %p162
      %p164 = scmp.ne.s32.totalorder %s152, %s153
      %p165 = scmp.eq.s32.totalorder %s27, 3
      %p166 = por %p164, %p165
      %p168 = scmp.ne.s32.totalorder %s153, %s167
      %p169 = scmp.eq.s32.totalorder %s27, 0
      %p170 = por %p168, %p169
      %s172 = sadd.s32 %s171, 1
      %p175 = scmp.eq.s32.totalorder %s21, 3
      %p176 = scmp.ne.s32.totalorder %s171, %s173
      %p177 = scmp.eq.s32.totalorder %s21, 0
      %p178 = por %p176, %p177
      %p179 = scmp.ne.s32.totalorder %s171, %s173
      %p180 = scmp.eq.s32.totalorder %s26, 3
      %p181 = por %p179, %p180
      %p182 = scmp.ne.s32.totalorder %s173, %s174
      %p183 = scmp.eq.s32.totalorder %s26, 0
      %p184 = por %p182, %p183
      %p185 = scmp.ne.s32.totalorder %s173, %s174
      %p186 = scmp.eq.s32.totalorder %s27, 3
      %p187 = por %p185, %p186
      %p189 = scmp.ne.s32.totalorder %s174, %s188
      %p190 = scmp.eq.s32.totalorder %s27, 0
      %p191 = por %p189, %p190
      %s192 = ssub.s32 %s28, %s47
      %p193 = scmp.eq.s32.totalorder %s192, 0
      %s195 = sadd.s32 %s194, 1
      %s196 = scalar_select %p193, %s194, %s195
      %p199 = pneg %p193
      %p200 = scmp.eq.s32.totalorder %s21, 3
      %p201 = por %p199, %p200
      %p202 = scmp.ne.s32.totalorder %s194, %s197
      %p203 = scmp.eq.s32.totalorder %s21, 0
      %p204 = por %p202, %p203
      %p205 = scmp.ne.s32.totalorder %s194, %s197
      %p206 = scmp.eq.s32.totalorder %s26, 3
      %p207 = por %p205, %p206
      %p208 = scmp.ne.s32.totalorder %s197, %s198
      %p209 = scmp.eq.s32.totalorder %s26, 0
      %p210 = por %p208, %p209
      %p211 = scmp.ne.s32.totalorder %s197, %s198
      %p212 = scmp.eq.s32.totalorder %s27, 3
      %p213 = por %p211, %p212
      %p215 = scmp.ne.s32.totalorder %s198, %s214
      %p216 = scmp.eq.s32.totalorder %s27, 0
      %p217 = por %p215, %p216
      %s218 = ssub.s32 %s28, %s47
      %p219 = scmp.eq.s32.totalorder %s218, 0
      %s221 = sadd.s32 %s220, 1
      %s222 = scalar_select %p219, %s220, %s221
      %p225 = pneg %p219
      %p226 = scmp.eq.s32.totalorder %s21, 3
      %p227 = por %p225, %p226
      %p228 = scmp.ne.s32.totalorder %s220, %s223
      %p229 = scmp.eq.s32.totalorder %s21, 0
      %p230 = por %p228, %p229
      %p231 = scmp.ne.s32.totalorder %s220, %s223
      %p232 = scmp.eq.s32.totalorder %s26, 3
      %p233 = por %p231, %p232
      %p234 = scmp.ne.s32.totalorder %s223, %s224
      %p235 = scmp.eq.s32.totalorder %s26, 0
      %p236 = por %p234, %p235
      %p237 = scmp.ne.s32.totalorder %s223, %s224
      %p238 = scmp.eq.s32.totalorder %s27, 3
      %p239 = por %p237, %p238
      %p241 = scmp.ne.s32.totalorder %s224, %s240
      %p242 = scmp.eq.s32.totalorder %s27, 0
      %p243 = por %p241, %p242
      %p244 = scmp.le.s32.totalorder 1, %s21
      %p245 = scmp.lt.s32.totalorder %s21, 5
      %p246 = pnand %p244, %p245
      %p247 = pneg %p246
      // Predicated region
      $region9: #{tpu_custom_call.1} parent=5 // pred_check
        _
      $region10: #{tpu_custom_call.1} parent=5 // pred_check_branch
        %249 = sbr.rel (%p246) target = $region12
      $region11: #{tpu_custom_call.1} parent=5 // pred_region
        %s250 = ssub.s32 %s21, 1
        // Predicated region
        $region13: #{tpu_custom_call.1} parent=11 // pred_check
          %p251 = pneg %p100
        $region14: #{tpu_custom_call.1} parent=11 // pred_check_branch
          %253 = sbr.rel (%p251) target = $region16
        $region15: #{tpu_custom_call.1} parent=11 // pred_region
          %s254 = smul.u32 4, %s31
          %s255 = ssub.s32 1, %s254
          %s256 = smul.u32 2, %s255
          %s257 = ssub.s32 8, %s256
          %s258 = sshll.u32 %s257, 4
          %259 = vsyncadd [#allocation8], %s258
          %p260 = scmp.ne.s32.totalorder 0, %s256
          %s261 = sadd.s32 %s32, %s254
          %s262 = smul.addr %s261, 2
          %s263 = scalar_lea.hbm %s1, %s262
          %s264 = smul.u32 2, %s255
          %s265 = sshll.u32 %s263, 4
          %s266 = int_to_ptr.hbm [resolvable:$true] %s265
          %s267 = sshll.u32 [#allocation7], 4
          %s268 = int_to_ptr.vmem [resolvable:$true] %s267
          %s269 = sshll.u32 %s264, 4
          %273 = dma.hbm_to_vmem [thread:$0]  (%p260), %s266, %s269, %s268, [#allocation8], 32, 32, 2
        $region16: #{tpu_custom_call.1} parent=11 // pred_fallthru
          _
        // Predicated region
        $region17: #{tpu_custom_call.1} parent=11 // pred_check
          %p274 = pneg %p121
        $region18: #{tpu_custom_call.1} parent=11 // pred_check_branch
          %276 = sbr.rel (%p274) target = $region20
        $region19: #{tpu_custom_call.1} parent=11 // pred_region
          %278 = vsyncadd [#allocation8], 0
          %s279 = sshll.u32 %s2, 4
          %s280 = int_to_ptr.hbm [resolvable:$true] %s279
          %s281 = sshll.u32 [#allocation9], 4
          %s282 = int_to_ptr.vmem [resolvable:$true] %s281
          %287 = dma.hbm_to_vmem [thread:$0]  %s280, 512, %s282, [#allocation8], 128, 128, 8
        $region20: #{tpu_custom_call.1} parent=11 // pred_fallthru
          _
        // Predicated region
        $region21: #{tpu_custom_call.1} parent=11 // pred_check
          %p288 = pneg %p142
        $region22: #{tpu_custom_call.1} parent=11 // pred_check_branch
          %290 = sbr.rel (%p288) target = $region24
        $region23: #{tpu_custom_call.1} parent=11 // pred_region
          _
        $region24: #{tpu_custom_call.1} parent=11 // pred_fallthru
          _
        // Predicated region
        $region25: #{tpu_custom_call.1} parent=11 // pred_check
          %p291 = pneg %p163
        $region26: #{tpu_custom_call.1} parent=11 // pred_check_branch
          %293 = sbr.rel (%p291) target = $region28
        $region27: #{tpu_custom_call.1} parent=11 // pred_region
          %295 = vsyncadd [#allocation11], 0
          %s296 = sshll.u32 %s4, 4
          %s297 = int_to_ptr.hbm [resolvable:$true] %s296
          %s298 = sshll.u32 [#allocation10], 4
          %s299 = int_to_ptr.vmem [resolvable:$true] %s298
          %304 = dma.hbm_to_vmem [thread:$0]  %s297, 2048, %s299, [#allocation11], 128, 128, 8
        $region28: #{tpu_custom_call.1} parent=11 // pred_fallthru
          _
        // Predicated region
        $region29: #{tpu_custom_call.1} parent=11 // pred_check
          %p305 = pneg %p184
        $region30: #{tpu_custom_call.1} parent=11 // pred_check_branch
          %307 = sbr.rel (%p305) target = $region32
        $region31: #{tpu_custom_call.1} parent=11 // pred_region
          _
        $region32: #{tpu_custom_call.1} parent=11 // pred_fallthru
          _
      $region12: #{tpu_custom_call.1} parent=5 // pred_fallthru
        _
      %p308 = scmp.lt.s32.totalorder %s21, 4
      // Predicated region
      $region33: #{tpu_custom_call.1} parent=5 // pred_check
        %p309 = pneg %p308
      $region34: #{tpu_custom_call.1} parent=5 // pred_check_branch
        %311 = sbr.rel (%p309) target = $region36
      $region35: #{tpu_custom_call.1} parent=5 // pred_region
        // Predicated region
        $region37: #{tpu_custom_call.1} parent=35 // pred_check
          %p312 = pneg %p66
        $region38: #{tpu_custom_call.1} parent=35 // pred_check_branch
          %314 = sbr.rel (%p312) target = $region40
        $region39: #{tpu_custom_call.1} parent=35 // pred_region
          %s315 = sand.u32 %s56, 1
          %s316 = scalar_lea.sflag [#allocation5], %s315
          %s317 = sand.u32 %s56, 1
          %s318 = smul.addr %s317, 32
          %s319 = scalar_lea.vmem [#allocation4], %s318
          %s320 = sadd.s32 %s30, 2
          %s321 = smul.u32 8, %s28
          %s322 = ssub.s32 2, %s321
          %s323 = smul.u32 4, %s322
          %s324 = ssub.s32 32, %s323
          %s325 = sshll.u32 %s324, 4
          %326 = vsyncadd %s316, %s325
          %p327 = scmp.ne.s32.totalorder 0, %s323
          %s328 = sadd.s32 %s29, %s321
          %s329 = smul.addr %s320, 2
          %s330 = sadd.s32 %s328, %s329
          %s331 = smul.addr %s330, 4
          %s332 = scalar_lea.hbm %s0, %s331
          %s333 = smul.u32 4, %s322
          %s334 = sshll.u32 %s332, 4
          %s335 = int_to_ptr.hbm [resolvable:$true] %s334
          %s336 = sshll.u32 %s319, 4
          %s337 = int_to_ptr.vmem [resolvable:$true] %s336
          %s338 = sshll.u32 %s333, 4
          %342 = dma.hbm_to_vmem [thread:$0]  (%p327), %s335, %s338, %s337, %s316, 64, 64, 4
        $region40: #{tpu_custom_call.1} parent=35 // pred_fallthru
          _
      $region36: #{tpu_custom_call.1} parent=5 // pred_fallthru
        _
      %p343 = scmp.le.s32.totalorder 1, %s21
      %p344 = scmp.lt.s32.totalorder %s21, 5
      %p345 = pnand %p343, %p344
      %p346 = pneg %p345
      // Predicated region
      $region41: #{tpu_custom_call.1} parent=5 // pred_check
        _
      $region42: #{tpu_custom_call.1} parent=5 // pred_check_branch
        %348 = sbr.rel (%p345) target = $region44
      $region43: #{tpu_custom_call.1} parent=5 // pred_region
        %s349 = ssub.s32 %s21, 1
        %s350 = sand.u32 %s59, 1
        %s351 = scalar_lea.sflag [#allocation5], %s350
        %s352 = sand.u32 %s59, 1
        %s353 = smul.addr %s352, 32
        %s354 = scalar_lea.vmem [#allocation4], %s353
        // Predicated region
        $region45: #{tpu_custom_call.1} parent=43 // pred_check
          %p355 = pneg %p72
        $region46: #{tpu_custom_call.1} parent=43 // pred_check_branch
          %357 = sbr.rel (%p355) target = $region48
        $region47: #{tpu_custom_call.1} parent=43 // pred_region
          %359 = dma.done %s351, 512
        $region48: #{tpu_custom_call.1} parent=43 // pred_fallthru
          _
        // Predicated region
        $region49: #{tpu_custom_call.1} parent=43 // pred_check
          %p360 = pneg %p100
        $region50: #{tpu_custom_call.1} parent=43 // pred_check_branch
          %362 = sbr.rel (%p360) target = $region52
        $region51: #{tpu_custom_call.1} parent=43 // pred_region
          %364 = dma.done [#allocation8], 128
        $region52: #{tpu_custom_call.1} parent=43 // pred_fallthru
          _
        // Predicated region
        $region53: #{tpu_custom_call.1} parent=43 // pred_check
          %p365 = pneg %p121
        $region54: #{tpu_custom_call.1} parent=43 // pred_check_branch
          %367 = sbr.rel (%p365) target = $region56
        $region55: #{tpu_custom_call.1} parent=43 // pred_region
          %369 = dma.done [#allocation8], 512
        $region56: #{tpu_custom_call.1} parent=43 // pred_fallthru
          _
        // Predicated region
        $region57: #{tpu_custom_call.1} parent=43 // pred_check
          %p370 = pneg %p163
        $region58: #{tpu_custom_call.1} parent=43 // pred_check_branch
          %372 = sbr.rel (%p370) target = $region60
        $region59: #{tpu_custom_call.1} parent=43 // pred_region
          %374 = dma.done [#allocation11], 2048
        $region60: #{tpu_custom_call.1} parent=43 // pred_fallthru
          _
        %s375 = sand.u32 %s59, 1
        %s376 = scalar_lea.sflag [#allocation5], %s375
        %s377 = sand.u32 %s59, 1
        %s378 = smul.addr %s377, 32
        %s379 = scalar_lea.vmem [#allocation4], %s378
        %p380 = pneg %p72
        %p381 = pneg %p69
        %p382 = pneg %p100
        %p383 = pneg %p97
        %p384 = pneg %p121
        %p385 = pneg %p118
        %p386 = pneg %p142
        %p387 = pneg %p139
        %p388 = pneg %p163
        %p389 = pneg %p160
        %p390 = pneg %p184
        %p391 = pneg %p181
        %p392 = pneg %p210
        %p393 = pneg %p207
        %p394 = pneg %p236
        %p395 = pneg %p233
        %s396 = sadd.s32 %s33, 2
        %s397 = smul.u32 8, %s31
        %s398 = ssub.s32 2, %s397
        %s399 = smul.u32 4, %s398
        %s400 = smul.u32 4, %s31
        %s401 = ssub.s32 1, %s400
        %s402 = smul.u32 2, %s401
        %p404 = scmp.eq.s32.totalorder %s32, 0
        %p405 = scmp.eq.s32.totalorder %s33, 0
        %p406 = pnand %p404, %p405
        %p407 = pneg %p406
        // Predicated region
        $region61: #{tpu_custom_call.1} parent=43 // pred_check
          _
        $region62: #{tpu_custom_call.1} parent=43 // pred_check_branch
          %409 = sbr.rel (%p406) target = $region64
        $region63: #{tpu_custom_call.1} parent=43 // pred_region
          %vm410 = vcmask 261120
          %411 = vst.msk [vmem:[#allocation2] sm:$0xff] %vm410, 0.0
          %vm412 = vcmask 7168
          %413 = vst.msk [vmem:[#allocation3] sm:$0xff] %vm412, 0.0
        $region64: #{tpu_custom_call.1} parent=43 // pred_fallthru
          _
        %v414 = vld [vmem:[%s354] sm:$0xf]
        %v415 = vld [vmem:[%s354 + $0x4] sm:$0xf]
        %v416 = vld [vmem:[%s354 + $0x8] sm:$0xf]
        %v417 = vld [vmem:[%s354 + $0xc] sm:$0xf]
        %v418 = vld [vmem:[%s354 + $0x10] sm:$0xf]
        %v419 = vld [vmem:[%s354 + $0x14] sm:$0xf]
        %v420 = vld [vmem:[%s354 + $0x18] sm:$0xf]
        %v421 = vld [vmem:[%s354 + $0x1c] sm:$0xf]
        %v422 = vld [vmem:[#allocation7] sm:$0xff]
        %v423 = vpack.c.bf16 %v422, %v422
        %v425 = vrot.slane %v423, 3
        %vm426 = vcmask 1040384
        %v429 = vsel %vm426, %v423, %v425
        %vm431 = vcmask 1041409
        %v432 = vsel %vm431, %v423, %v425
        %v434 = vrot.slane %v432, 1
        %vm435 = vcmask 1042434
        %v436 = vsel %vm435, %v423, %v425
        %v438 = vrot.slane %v436, 2
        %vm439 = vcmask 1043459
        %v440 = vsel %vm439, %v423, %v425
        %v442 = vrot.slane %v440, 3
        %v443 = vunpack.i.l.s16 %v429
        %v444 = vunpack.i.h.s16 %v429
        %v445 = vunpack.i.l.s16 %v434
        %v446 = vunpack.i.h.s16 %v434
        %v447 = vunpack.i.l.s16 %v438
        %v448 = vunpack.i.h.s16 %v438
        %v449 = vunpack.i.l.s16 %v442
        %v450 = vunpack.i.h.s16 %v442
        %v451 = vpack.i.b16 %v443, %v443
        %v452 = vperm.slane %v451, 0
        %vm453 = vcmask 64512
        %v455 = vsel %vm453, %v452, 0
        %vm457 = vcmask 1043456
        %v459 = vsel %vm457, %v414, 0
        %461 = vmatpush.bf16.msra.mxu0 0
        %462 = vmatpush.bf16.msra.mxu0 0
        %463 = vmatpush.bf16.msra.mxu0 0
        %464 = vmatpush.bf16.msra.mxu0 0
        %465 = vmatpush.bf16.msra.mxu0 0
        %466 = vmatpush.bf16.msra.mxu0 0
        %467 = vmatpush.bf16.msra.mxu0 0
        %468 = vmatpush.bf16.msra.mxu0 %v459
        %469 = vmatmul.bf16.gmra.mxu0 %v455
        %v470 = vpop.f32.mrf.mxu0
        %v471 = vadd.f32 0.0, %v470
        %v472 = vpop.f32.mrf.mxu0
        %473 = vdwg.mxu0
        %v474 = vpack.i.b16 %v444, %v444
        %v475 = vperm.slane %v474, 0
        %v477 = vsel %vm453, %v475, 0
        %v480 = vsel %vm457, %v415, 0
        %482 = vmatpush.bf16.msra.mxu0 0
        %483 = vmatpush.bf16.msra.mxu0 0
        %484 = vmatpush.bf16.msra.mxu0 0
        %485 = vmatpush.bf16.msra.mxu0 0
        %486 = vmatpush.bf16.msra.mxu0 0
        %487 = vmatpush.bf16.msra.mxu0 0
        %488 = vmatpush.bf16.msra.mxu0 0
        %489 = vmatpush.bf16.msra.mxu0 %v480
        %490 = vmatmul.bf16.gmra.mxu0 %v477
        %v491 = vpop.f32.mrf.mxu0
        %v492 = vadd.f32 0.0, %v491
        %v493 = vpop.f32.mrf.mxu0
        %494 = vdwg.mxu0
        %v495 = vpack.i.b16 %v445, %v445
        %v496 = vperm.slane %v495, 0
        %v498 = vsel %vm453, %v496, 0
        %v501 = vsel %vm457, %v416, 0
        %503 = vmatpush.bf16.msra.mxu0 0
        %504 = vmatpush.bf16.msra.mxu0 0
        %505 = vmatpush.bf16.msra.mxu0 0
        %506 = vmatpush.bf16.msra.mxu0 0
        %507 = vmatpush.bf16.msra.mxu0 0
        %508 = vmatpush.bf16.msra.mxu0 0
        %509 = vmatpush.bf16.msra.mxu0 0
        %510 = vmatpush.bf16.msra.mxu0 %v501
        %511 = vmatmul.bf16.gmra.mxu0 %v498
        %v512 = vpop.f32.mrf.mxu0
        %v513 = vadd.f32 0.0, %v512
        %v514 = vpop.f32.mrf.mxu0
        %515 = vdwg.mxu0
        %v516 = vpack.i.b16 %v446, %v446
        %v517 = vperm.slane %v516, 0
        %v519 = vsel %vm453, %v517, 0
        %v522 = vsel %vm457, %v417, 0
        %524 = vmatpush.bf16.msra.mxu0 0
        %525 = vmatpush.bf16.msra.mxu0 0
        %526 = vmatpush.bf16.msra.mxu0 0
        %527 = vmatpush.bf16.msra.mxu0 0
        %528 = vmatpush.bf16.msra.mxu0 0
        %529 = vmatpush.bf16.msra.mxu0 0
        %530 = vmatpush.bf16.msra.mxu0 0
        %531 = vmatpush.bf16.msra.mxu0 %v522
        %532 = vmatmul.bf16.gmra.mxu0 %v519
        %v533 = vpop.f32.mrf.mxu0
        %v534 = vadd.f32 0.0, %v533
        %v535 = vpop.f32.mrf.mxu0
        %536 = vdwg.mxu0
        %v537 = vpack.i.b16 %v447, %v447
        %v538 = vperm.slane %v537, 0
        %v540 = vsel %vm453, %v538, 0
        %v543 = vsel %vm457, %v418, 0
        %545 = vmatpush.bf16.msra.mxu0 0
        %546 = vmatpush.bf16.msra.mxu0 0
        %547 = vmatpush.bf16.msra.mxu0 0
        %548 = vmatpush.bf16.msra.mxu0 0
        %549 = vmatpush.bf16.msra.mxu0 0
        %550 = vmatpush.bf16.msra.mxu0 0
        %551 = vmatpush.bf16.msra.mxu0 0
        %552 = vmatpush.bf16.msra.mxu0 %v543
        %553 = vmatmul.bf16.gmra.mxu0 %v540
        %v554 = vpop.f32.mrf.mxu0
        %v555 = vadd.f32 0.0, %v554
        %v556 = vpop.f32.mrf.mxu0
        %557 = vdwg.mxu0
        %v558 = vpack.i.b16 %v448, %v448
        %v559 = vperm.slane %v558, 0
        %v561 = vsel %vm453, %v559, 0
        %v564 = vsel %vm457, %v419, 0
        %566 = vmatpush.bf16.msra.mxu0 0
        %567 = vmatpush.bf16.msra.mxu0 0
        %568 = vmatpush.bf16.msra.mxu0 0
        %569 = vmatpush.bf16.msra.mxu0 0
        %570 = vmatpush.bf16.msra.mxu0 0
        %571 = vmatpush.bf16.msra.mxu0 0
        %572 = vmatpush.bf16.msra.mxu0 0
        %573 = vmatpush.bf16.msra.mxu0 %v564
        %574 = vmatmul.bf16.gmra.mxu0 %v561
        %v575 = vpop.f32.mrf.mxu0
        %v576 = vadd.f32 0.0, %v575
        %v577 = vpop.f32.mrf.mxu0
        %578 = vdwg.mxu0
        %v579 = vpack.i.b16 %v449, %v449
        %v580 = vperm.slane %v579, 0
        %v582 = vsel %vm453, %v580, 0
        %v585 = vsel %vm457, %v420, 0
        %587 = vmatpush.bf16.msra.mxu0 0
        %588 = vmatpush.bf16.msra.mxu0 0
        %589 = vmatpush.bf16.msra.mxu0 0
        %590 = vmatpush.bf16.msra.mxu0 0
        %591 = vmatpush.bf16.msra.mxu0 0
        %592 = vmatpush.bf16.msra.mxu0 0
        %593 = vmatpush.bf16.msra.mxu0 0
        %594 = vmatpush.bf16.msra.mxu0 %v585
        %595 = vmatmul.bf16.gmra.mxu0 %v582
        %v596 = vpop.f32.mrf.mxu0
        %v597 = vadd.f32 0.0, %v596
        %v598 = vpop.f32.mrf.mxu0
        %599 = vdwg.mxu0
        %v600 = vpack.i.b16 %v450, %v450
        %v601 = vperm.slane %v600, 0
        %v603 = vsel %vm453, %v601, 0
        %v606 = vsel %vm457, %v421, 0
        %608 = vmatpush.bf16.msra.mxu0 0
        %609 = vmatpush.bf16.msra.mxu0 0
        %610 = vmatpush.bf16.msra.mxu0 0
        %611 = vmatpush.bf16.msra.mxu0 0
        %612 = vmatpush.bf16.msra.mxu0 0
        %613 = vmatpush.bf16.msra.mxu0 0
        %614 = vmatpush.bf16.msra.mxu0 0
        %615 = vmatpush.bf16.msra.mxu0 %v606
        %616 = vmatmul.bf16.gmra.mxu0 %v603
        %v617 = vpop.f32.mrf.mxu0
        %v618 = vadd.f32 0.0, %v617
        %v619 = vpop.f32.mrf.mxu0
        %620 = vdwg.mxu0
        %v621 = vld [vmem:[#allocation2] sm:$0xff]
        %v630 = vrot.slane %v492, 7
        %v631 = vsel %vm431, %v630, %v471
        %v632 = vrot.slane %v513, 6
        %v633 = vsel %vm435, %v632, %v631
        %v634 = vrot.slane %v534, 5
        %v635 = vsel %vm439, %v634, %v633
        %v636 = vrot.slane %v555, 4
        %vm637 = vcmask 1044484
        %v638 = vsel %vm637, %v636, %v635
        %v639 = vrot.slane %v576, 3
        %vm640 = vcmask 1045509
        %v641 = vsel %vm640, %v639, %v638
        %v642 = vrot.slane %v597, 2
        %vm643 = vcmask 1046534
        %v644 = vsel %vm643, %v642, %v641
        %v645 = vrot.slane %v618, 1
        %vm646 = vcmask 1047559
        %v647 = vsel %vm646, %v645, %v644
        %v649 = vadd.f32 %v621, %v647
        %vm650 = vcmask 261120
        %651 = vst.msk [vmem:[#allocation2] sm:$0xff] %vm650, %v649
        // Predicated region
        $region65: #{tpu_custom_call.1} parent=43 // pred_check
          %p652 = pneg %p405
        $region66: #{tpu_custom_call.1} parent=43 // pred_check_branch
          %654 = sbr.rel (%p652) target = $region68
        $region67: #{tpu_custom_call.1} parent=43 // pred_region
          %v655 = vld [vmem:[#allocation3] sm:$0xff]
          %v656 = vsel %vm453, %v422, 0.0
          %657 = vadd.xlane.f32.xlu0 %v656
          %v658 = vpop.xlane.xlu0 %657
          %v659 = vadd.f32 %v655, %v658
          %vm660 = vcmask 7168
          %661 = vst.msk [vmem:[#allocation3] sm:$0xff] %vm660, %v659
        $region68: #{tpu_custom_call.1} parent=43 // pred_fallthru
          _
        %p662 = scmp.eq.s32.totalorder %s33, 3
        %p663 = pnand %p404, %p662
        %p664 = pneg %p663
        // Predicated region
        $region69: #{tpu_custom_call.1} parent=43 // pred_check
          _
        $region70: #{tpu_custom_call.1} parent=43 // pred_check_branch
          %666 = sbr.rel (%p663) target = $region72
        $region71: #{tpu_custom_call.1} parent=43 // pred_region
          %v667 = vld [vmem:[#allocation2] sm:$0xff]
          %v668 = vld [vmem:[#allocation3] sm:$0xff]
          %v669 = vrcp.pop %v668
          %v670 = vmul.f32 %v668, %v669
          %v671 = vsub.f32 1.0, %v670
          %v672 = vmul.f32 %v669, %v671
          %v673 = vadd.f32 %v669, %v672
          %vm674 = vweird.f32 %v668
          %vm675 = vweird.f32 %v669
          %vm676 = vmor %vm674, %vm675
          %v677 = vsel %vm676, %v669, %v673
          %v678 = vand.u32 2147483647, %v668
          %vm679 = vcmp.eq.f32.partialorder %v678, 8.507059e+37
          %v680 = vand.u32 %v668, 2147483648
          %v681 = vor.u32 1.1754944e-38, %v680
          %v682 = vsel %vm679, %v681, %v677
          %684 = vset.pattern.permute.xlu0 0
          %685 = vperm.xlu0 %684, %v682
          %v686 = vpop.permute.xlu0 %685
          %v688 = vmul.f32 %v667, %v686
          %v689 = vld [vmem:[#allocation9] sm:$0xff]
          %v690 = vld [vmem:[#allocation9 + $0x8] sm:$0xff]
          %v691 = vld [vmem:[#allocation9 + $0x10] sm:$0xff]
          %v692 = vld [vmem:[#allocation9 + $0x18] sm:$0xff]
          %v693 = vld [vmem:[%s3] sm:$0x1]
          %v695 = vperm.slane %v693, 0
          %v698 = vsel %vm650, %v688, 0
          %700 = vmatpush.msra.mxu0 0.0
          %701 = vmatpush.msra.mxu0 0.0
          %702 = vmatpush.msra.mxu0 0.0
          %703 = vmatpush.msra.mxu0 0.0
          %704 = vmatpush.msra.mxu0 0.0
          %705 = vmatpush.msra.mxu0 0.0
          %706 = vmatpush.msra.mxu0 0.0
          %707 = vmatpush.msra.mxu0 0.0
          %708 = vmatpush.msra.mxu0 0.0
          %709 = vmatpush.msra.mxu0 0.0
          %710 = vmatpush.msra.mxu0 0.0
          %711 = vmatpush.msra.mxu0 0.0
          %712 = vmatpush.msra.mxu0 %v692
          %713 = vmatpush.msra.mxu0 %v691
          %714 = vmatpush.msra.mxu0 %v690
          %715 = vmatpush.msra.mxu0 %v689
          %716 = vmatmul.f32.gmra.mxu0 %v698
          %v717 = vpop.f32.mrf.mxu0
          %v718 = vadd.f32 %v695, %v717
          %719 = vdwg.mxu0
          %v720 = vmax.f32 %v718, 0.0
          %721 = vst [vmem:[#allocation12] sm:$0xff] %v720
          %v722 = vld [vmem:[#allocation10] sm:$0xff]
          %v723 = vld [vmem:[#allocation10 + $0x8] sm:$0xff]
          %v724 = vld [vmem:[#allocation10 + $0x10] sm:$0xff]
          %v725 = vld [vmem:[#allocation10 + $0x18] sm:$0xff]
          %v726 = vld [vmem:[#allocation10 + $0x20] sm:$0xff]
          %v727 = vld [vmem:[#allocation10 + $0x28] sm:$0xff]
          %v728 = vld [vmem:[#allocation10 + $0x30] sm:$0xff]
          %v729 = vld [vmem:[#allocation10 + $0x38] sm:$0xff]
          %v730 = vld [vmem:[#allocation10 + $0x40] sm:$0xff]
          %v731 = vld [vmem:[#allocation10 + $0x48] sm:$0xff]
          %v732 = vld [vmem:[#allocation10 + $0x50] sm:$0xff]
          %v733 = vld [vmem:[#allocation10 + $0x58] sm:$0xff]
          %v734 = vld [vmem:[#allocation10 + $0x60] sm:$0xff]
          %v735 = vld [vmem:[#allocation10 + $0x68] sm:$0xff]
          %v736 = vld [vmem:[#allocation10 + $0x70] sm:$0xff]
          %v737 = vld [vmem:[#allocation10 + $0x78] sm:$0xff]
          %v738 = vld [vmem:[%s5] sm:$0x1]
          %v740 = vperm.slane %v738, 0
          %742 = vmatpush.msra.mxu0 %v737
          %743 = vmatpush.msra.mxu0 %v736
          %744 = vmatpush.msra.mxu0 %v735
          %745 = vmatpush.msra.mxu0 %v734
          %746 = vmatpush.msra.mxu0 %v733
          %747 = vmatpush.msra.mxu0 %v732
          %748 = vmatpush.msra.mxu0 %v731
          %749 = vmatpush.msra.mxu0 %v730
          %750 = vmatpush.msra.mxu0 %v729
          %751 = vmatpush.msra.mxu0 %v728
          %752 = vmatpush.msra.mxu0 %v727
          %753 = vmatpush.msra.mxu0 %v726
          %754 = vmatpush.msra.mxu0 %v725
          %755 = vmatpush.msra.mxu0 %v724
          %756 = vmatpush.msra.mxu0 %v723
          %757 = vmatpush.msra.mxu0 %v722
          %758 = vmatmul.f32.gmra.mxu0 %v720
          %v759 = vpop.f32.mrf.mxu0
          %v760 = vadd.f32 %v740, %v759
          %761 = vdwg.mxu0
          %762 = vst [vmem:[#allocation13] sm:$0xff] %v760
        $region72: #{tpu_custom_call.1} parent=43 // pred_fallthru
          _
        // Predicated region
        $region73: #{tpu_custom_call.1} parent=43 // pred_check
          %p763 = pneg %p207
        $region74: #{tpu_custom_call.1} parent=43 // pred_check_branch
          %765 = sbr.rel (%p763) target = $region76
        $region75: #{tpu_custom_call.1} parent=43 // pred_region
          %767 = vsyncadd [#allocation6], 0
          %s768 = smul.addr %s31, 8
          %s769 = scalar_lea.hbm %s6, %s768
          %s771 = sshll.u32 [#allocation12], 4
          %s772 = int_to_ptr.vmem [resolvable:$true] %s771
          %s773 = sshll.u32 %s769, 4
          %s774 = int_to_ptr.hbm [resolvable:$true] %s773
          %776 = dma.vmem_to_hbm [thread:$0]  %s772, 128, %s774, [#allocation6]
        $region76: #{tpu_custom_call.1} parent=43 // pred_fallthru
          _
        // Predicated region
        $region77: #{tpu_custom_call.1} parent=43 // pred_check
          %p777 = pneg %p233
        $region78: #{tpu_custom_call.1} parent=43 // pred_check_branch
          %779 = sbr.rel (%p777) target = $region80
        $region79: #{tpu_custom_call.1} parent=43 // pred_region
          %781 = vsyncadd [#allocation14], 0
          %s782 = smul.addr %s31, 8
          %s783 = scalar_lea.hbm %s7, %s782
          %s785 = sshll.u32 [#allocation13], 4
          %s786 = int_to_ptr.vmem [resolvable:$true] %s785
          %s787 = sshll.u32 %s783, 4
          %s788 = int_to_ptr.hbm [resolvable:$true] %s787
          %790 = dma.vmem_to_hbm [thread:$0]  %s786, 128, %s788, [#allocation14]
        $region80: #{tpu_custom_call.1} parent=43 // pred_fallthru
          _
        // Predicated region
        $region81: #{tpu_custom_call.1} parent=43 // pred_check
          %p791 = pneg %p207
        $region82: #{tpu_custom_call.1} parent=43 // pred_check_branch
          %793 = sbr.rel (%p791) target = $region84
        $region83: #{tpu_custom_call.1} parent=43 // pred_region
          %795 = dma.done [#allocation6], 128
        $region84: #{tpu_custom_call.1} parent=43 // pred_fallthru
          _
        // Predicated region
        $region85: #{tpu_custom_call.1} parent=43 // pred_check
          %p796 = pneg %p233
        $region86: #{tpu_custom_call.1} parent=43 // pred_check_branch
          %798 = sbr.rel (%p796) target = $region88
        $region87: #{tpu_custom_call.1} parent=43 // pred_region
          %800 = dma.done [#allocation14], 128
        $region88: #{tpu_custom_call.1} parent=43 // pred_fallthru
          _
      $region44: #{tpu_custom_call.1} parent=5 // pred_fallthru
        _
      %p801 = scmp.le.s32.totalorder 2, %s21
      // Predicated region
      $region89: #{tpu_custom_call.1} parent=5 // pred_check
        %p802 = pneg %p801
      $region90: #{tpu_custom_call.1} parent=5 // pred_check_branch
        %804 = sbr.rel (%p802) target = $region92
      $region91: #{tpu_custom_call.1} parent=5 // pred_region
        %s805 = ssub.s32 %s21, 2
      $region92: #{tpu_custom_call.1} parent=5 // pred_fallthru
        _
    $region6: #{tpu_custom_call.1} parent=1 // loop_footer
      %s25 = sadd.s32 1, %s21
    $region7: #{tpu_custom_call.1} parent=1 // loop_footer_branch
      %20 = sbr.rel target = $region3
    $region8: #{tpu_custom_call.1} parent=1 // loop_exit
      _
    %806 = vsyncpa [#allocation5], 1
    %s807 = scalar_lea.sflag [#allocation5], 1
    %808 = vsyncpa %s807, 1
    %809 = vsyncpa [#allocation8], 1
    %810 = vsyncpa [#allocation11], 1
    %811 = vsyncpa [#allocation6], 1
    %s812 = scalar_lea.sflag [#allocation6], 1
    %813 = vsyncpa %s812, 1
    %814 = vsyncpa [#allocation14], 1

</llo_original>
